<compile_context>
chip_gen: v7x
topology: tpu7x:2x2x1
jax: 0.10.0
libtpu: 0.0.40
codegen_flags: <defaults>
</compile_context>

<pallas_src>
import functools

import jax
import jax.numpy as jnp
from jax import lax
from jax.experimental import pallas as pl
from jax.experimental.pallas import tpu as pltpu

LANE = 128


def _mlp_kernel(w_ref, x_ref, o_ref, *, chunk):
    """One grid step: x_ref is a [2, TB] lane-dense tile of x^T, o_ref the
    matching [1, TB] tile of out^T.  Work proceeds in `chunk`-lane slices so
    intermediates stay small no matter how large TB gets."""
    w = w_ref[...]                       # [24, 128] packed slab (VMEM resident)
    w1 = w[0:16, 0:2]                    # [16, 2]   W1
    b1 = w[0:16, 2:3]                    # [16, 1]
    w2 = w[16:24, 0:16]                  # [8, 16]   W2
    b2 = w[16:24, 16:17]                 # [8, 1]
    w3 = w[16:24, 17:18]                 # [8, 1]    W3^T
    b3 = w[16:17, 18:19]                 # [1, 1]

    n_chunks = x_ref.shape[1] // chunk   # static (TB is a multiple of chunk)

    def body(c, carry):
        off = pl.multiple_of(c * chunk, chunk)
        x = x_ref[:, pl.ds(off, chunk)]                               # [2, chunk]
        # Layer 1: Linear(2 -> 16) + ReLU, K=2 contraction on the idle MXU.
        h1 = jnp.maximum(
            jnp.dot(w1, x, preferred_element_type=jnp.float32) + b1, 0.0)
        # Layer 2: Linear(16 -> 8) + ReLU.
        h2 = jnp.maximum(
            jnp.dot(w2, h1, preferred_element_type=jnp.float32) + b2, 0.0)
        # Layer 3: Linear(8 -> 1): VPU multiply + sublane (XLU) reduce.
        out = jnp.sum(w3 * h2, axis=0, keepdims=True) + b3            # [1, chunk]
        o_ref[:, pl.ds(off, chunk)] = out.astype(o_ref.dtype)
        return carry

    lax.fori_loop(0, n_chunks, body, 0, unroll=True)


def pack_params(params):
    """Pack all weights/biases (PyTorch layout: W [out,in], b [out]) into one
    (24,128) f32 slab -> a single resident DMA, sliced statically in-kernel."""
    w1, b1, w2, b2, w3, b3 = params
    slab = jnp.zeros((24, 128), jnp.float32)
    slab = slab.at[0:16, 0:2].set(w1)          # W1 [16, 2]
    slab = slab.at[0:16, 2].set(b1)            # b1 [16]
    slab = slab.at[16:24, 0:16].set(w2)        # W2 [8, 16]
    slab = slab.at[16:24, 16].set(b2)          # b2 [8]
    slab = slab.at[16:24, 17].set(w3[0, :])    # W3^T [8]
    slab = slab.at[16, 18].set(b3[0])          # b3 scalar
    return slab


def _choose_tiles(B, *, max_block_b, chunk):
    """Pick (TB, chunk): TB multiple of chunk, chunk multiple of 128, >= 2 grid
    steps when the batch allows (v7x megacore), TB capped near max_block_b."""
    Bl = pl.cdiv(B, LANE) * LANE
    steps = max(2, pl.cdiv(Bl, max_block_b)) if Bl >= 2 * LANE else 1
    tb = pl.cdiv(pl.cdiv(Bl, steps), LANE) * LANE
    tb = min(tb, max(LANE, (max_block_b // LANE) * LANE))
    chunk = max(LANE, min((chunk // LANE) * LANE, tb))
    tb = pl.cdiv(tb, chunk) * chunk
    return tb, chunk


def step_predictor_forward_t(xT, slab, *, max_block_b=32768, chunk=2048):
    """xT: [2, B] float32 (x pre-transposed: batch on the lane axis).
    Returns [B, 1] float32."""
    _, B = xT.shape
    TB, chunk = _choose_tiles(B, max_block_b=max_block_b, chunk=chunk)
    grid = pl.cdiv(B, TB)

    out = pl.pallas_call(
        functools.partial(_mlp_kernel, chunk=chunk),
        out_shape=jax.ShapeDtypeStruct((1, B), jnp.float32),
        grid=(grid,),
        in_specs=[
            pl.BlockSpec((24, 128), lambda i: (0, 0)),   # weights: constant -> resident
            pl.BlockSpec((2, TB), lambda i: (0, i)),     # x^T tile, pipelined over batch
        ],
        out_specs=pl.BlockSpec((1, TB), lambda i: (0, i)),
        compiler_params=pltpu.CompilerParams(
            dimension_semantics=("parallel",)),
    )(slab, xT)

    return out.reshape(B, 1)


def step_predictor_forward(x, slab, **kwargs):
    """x: [B, 2] float32. Returns [B, 1] float32 (PyTorch StepPredictor.forward)."""
    # TODO(synk): if the producer can emit x already as [2, B] (features on
    # sublanes, batch on lanes), call step_predictor_forward_t directly and skip
    # this extra transpose pass over HBM.
    return step_predictor_forward_t(x.astype(jnp.float32).T, slab, **kwargs)


def init_params(key):
    """PyTorch-style nn.Linear init: W [out,in], b [out], U(-1/sqrt(fan_in), +)."""
    def linear(k, fan_in, fan_out):
        kw, kb = jax.random.split(k)
        bound = fan_in ** -0.5
        w = jax.random.uniform(kw, (fan_out, fan_in), jnp.float32, -bound, bound)
        b = jax.random.uniform(kb, (fan_out,), jnp.float32, -bound, bound)
        return w, b

    k1, k2, k3 = jax.random.split(key, 3)
    w1, b1 = linear(k1, 2, 16)
    w2, b2 = linear(k2, 16, 8)
    w3, b3 = linear(k3, 8, 1)
    return (w1, b1, w2, b2, w3, b3)


def reference_forward(x, params):
    w1, b1, w2, b2, w3, b3 = params
    h1 = jnp.maximum(x @ w1.T + b1, 0.0)
    h2 = jnp.maximum(h1 @ w2.T + b2, 0.0)
    return h2 @ w3.T + b3


if __name__ == "__main__":
    key = jax.random.PRNGKey(0)
    kx, kx2, kp = jax.random.split(key, 3)

    params = init_params(kp)
    slab = pack_params(params)

    # Small shape consistent with the module (batch=8 rows of 2 features).
    batch = 8
    x = jax.random.normal(kx, (batch, 2), jnp.float32)
    out = jax.block_until_ready(step_predictor_forward(x, slab))
    ref = reference_forward(x, params)
    assert out.shape == (batch, 1), out.shape
    assert jnp.allclose(out, ref, atol=1e-5, rtol=1e-5), (out, ref)

    # Larger, non-aligned batch: exercises the 2-step "parallel" grid, the
    # ragged final block (no wrapper-side pad), and the inner chunk loop.
    batch2 = 1500
    x2 = jax.random.normal(kx2, (batch2, 2), jnp.float32)
    out2 = jax.block_until_ready(step_predictor_forward(x2, slab))
    ref2 = reference_forward(x2, params)
    assert out2.shape == (batch2, 1), out2.shape
    assert jnp.allclose(out2, ref2, atol=1e-5, rtol=1e-5)

    print("KERNEL_OK")
</pallas_src>

<mosaic_0001>
module attributes {stable_mosaic.version = 11 : i64} {
  func.func @_mlp_kernel(%arg0: i32, %arg1: memref<24x128xf32, #tpu.memory_space<vmem>>, %arg2: memref<2x128xf32, #tpu.memory_space<vmem>>, %arg3: memref<1x128xf32, #tpu.memory_space<vmem>>) attributes {dimension_semantics = [#tpu.dimension_semantics<parallel>], iteration_bounds = array<i64: 1>, scalar_prefetch = 0 : i64, scratch_operands = 0 : i64, tpu.core_type = #tpu.core_type<tc>, window_params = [{pipeline_mode = #tpu.pipeline_mode<synchronous>, transform_indices = @transform_0, window_bounds = array<i64: 24, 128>}, {transform_indices = @transform_1, window_bounds = array<i64: 2, 128>}, {transform_indices = @transform_2, window_bounds = array<i64: 1, 128>}]} {
    %c0 = arith.constant 0 : index
    %c0_0 = arith.constant 0 : index
    %0 = vector.load %arg1[%c0, %c0_0] : memref<24x128xf32, #tpu.memory_space<vmem>>, vector<24x128xf32>
    %1 = vector.extract_strided_slice %0 {offsets = [0, 0], sizes = [16, 2], strides = [1, 1]} : vector<24x128xf32> to vector<16x2xf32>
    %2 = vector.extract_strided_slice %0 {offsets = [0, 2], sizes = [16, 1], strides = [1, 1]} : vector<24x128xf32> to vector<16x1xf32>
    %3 = vector.extract_strided_slice %0 {offsets = [16, 0], sizes = [8, 16], strides = [1, 1]} : vector<24x128xf32> to vector<8x16xf32>
    %4 = vector.extract_strided_slice %0 {offsets = [16, 16], sizes = [8, 1], strides = [1, 1]} : vector<24x128xf32> to vector<8x1xf32>
    %5 = vector.extract_strided_slice %0 {offsets = [16, 17], sizes = [8, 1], strides = [1, 1]} : vector<24x128xf32> to vector<8x1xf32>
    %6 = vector.extract_strided_slice %0 {offsets = [16, 18], sizes = [1, 1], strides = [1, 1]} : vector<24x128xf32> to vector<1x1xf32>
    %c0_i32 = arith.constant 0 : i32
    %c128_i32 = arith.constant 128 : i32
    %7 = arith.muli %c0_i32, %c128_i32 : i32
    %8 = tpu.assume_multiple %7, 128 : i32
    %c0_1 = arith.constant 0 : index
    %9 = arith.index_cast %8 : i32 to index
    %10 = vector.load %arg2[%c0_1, %9] : memref<2x128xf32, #tpu.memory_space<vmem>>, vector<2x128xf32>
    %cst = arith.constant dense<0.000000e+00> : vector<16x128xf32>
    %11 = tpu.matmul %1, %10, %cst {dimension_numbers = #tpu.dot_dimension_numbers<[1], [0], [0], [1], [0, 0, 1, 1], [], []>} : vector<16x2xf32>, vector<2x128xf32>, vector<16x128xf32> -> vector<16x128xf32>
    %12 = vector.broadcast %2 : vector<16x1xf32> to vector<16x128xf32>
    %13 = arith.addf %11, %12 : vector<16x128xf32>
    %cst_2 = arith.constant 0.000000e+00 : f32
    %14 = vector.broadcast %cst_2 : f32 to vector<16x128xf32>
    %15 = arith.maximumf %13, %14 : vector<16x128xf32>
    %cst_3 = arith.constant dense<0.000000e+00> : vector<8x128xf32>
    %16 = tpu.matmul %3, %15, %cst_3 {dimension_numbers = #tpu.dot_dimension_numbers<[1], [0], [0], [1], [0, 0, 1, 1], [], []>} : vector<8x16xf32>, vector<16x128xf32>, vector<8x128xf32> -> vector<8x128xf32>
    %17 = vector.broadcast %4 : vector<8x1xf32> to vector<8x128xf32>
    %18 = arith.addf %16, %17 : vector<8x128xf32>
    %cst_4 = arith.constant 0.000000e+00 : f32
    %19 = vector.broadcast %cst_4 : f32 to vector<8x128xf32>
    %20 = arith.maximumf %18, %19 : vector<8x128xf32>
    %21 = vector.broadcast %5 : vector<8x1xf32> to vector<8x128xf32>
    %22 = arith.mulf %21, %20 : vector<8x128xf32>
    %cst_5 = arith.constant dense<0.000000e+00> : vector<128xf32>
    %23 = vector.multi_reduction <add>, %22, %cst_5 [0] : vector<8x128xf32> to vector<128xf32>
    %24 = vector.shape_cast %23 : vector<128xf32> to vector<1x128xf32>
    %25 = vector.broadcast %6 : vector<1x1xf32> to vector<1x128xf32>
    %26 = arith.addf %24, %25 : vector<1x128xf32>
    %c0_6 = arith.constant 0 : index
    %27 = arith.index_cast %8 : i32 to index
    %28 = vector.load %arg3[%c0_6, %27] : memref<1x128xf32, #tpu.memory_space<vmem>>, vector<1x128xf32>
    tpu.vector_store %arg3[%c0_6, %27], %26 {strides = array<i32>} : memref<1x128xf32, #tpu.memory_space<vmem>>, vector<1x128xf32>,
    %c1_i32 = arith.constant 1 : i32
    return
  }
  func.func @transform_0(%arg0: i32) -> (i32, i32) {
    %c0_i32 = arith.constant 0 : i32
    %c0_i32_0 = arith.constant 0 : i32
    %c0_i32_1 = arith.constant 0 : i32
    return %c0_i32, %c0_i32_0 : i32, i32
  }
  func.func @transform_1(%arg0: i32) -> (i32, i32) {
    %c0_i32 = arith.constant 0 : i32
    %c0_i32_0 = arith.constant 0 : i32
    return %c0_i32, %arg0 : i32, i32
  }
  func.func @transform_2(%arg0: i32) -> (i32, i32) {
    %c0_i32 = arith.constant 0 : i32
    %c0_i32_0 = arith.constant 0 : i32
    return %c0_i32, %arg0 : i32, i32
  }
}

</mosaic_0001>

<llo_original>
// kernel: tpu_custom_call.1
$region0: #{tpu_custom_call.1}
  #allocation0 [shape = 'u32[]', space=smem, size = 0x4, offset = 0x4, fixed_abs, tag = 'smem constant byte address 0x4 - core index']
  #allocation1 [shape = 'u32[144,128]{1,0:T(1,128)}', space=vmem, size = 0x12000, scoped, tag = 'internal scratch']
  %s0 = inlined_call_operand.hbm [shape: f32[24,128], index: 0, kind: input, shape index: {}]
  %s1 = inlined_call_operand.vmem [shape: f32[2,8], index: 1, kind: input, shape index: {}]
  %s2 = inlined_call_operand.hbm [shape: f32[1,8], index: 2, kind: output, shape index: {}]
  %s3 = sld [smem:[#allocation0]]
  $region22: #{tpu_custom_call.1} parent=0
    _
  %s5 = ssub.s32 1, %s3
  %s6 = scalar_select 0, %s5, %s3
  $region1: #{tpu_custom_call.1} parent=0
    #allocation2 [shape = 'u8[12288]{0}', space=vmem, size = 0x3000, scoped, tag = 'input window, operand 0, single buffered']
    #allocation3 [shape = 's32[1]{0}', space=sflag, size = 0x4, scoped, tag = 'scoped memory for tpu_custom_call.1']
    #allocation4 [shape = 's32[1]{0}', space=sflag, size = 0x4, scoped, tag = 'scoped memory for tpu_custom_call.1']
    #allocation5 [shape = 'u8[512]{0}', space=vmem, size = 0x400, scoped, tag = 'output window, operand 0, single buffered']
    %7 = vsyncpa [#allocation3], 0
    %8 = vsyncpa [#allocation4], 0
    // Predicated region
    $region2: #{tpu_custom_call.1} parent=1 // pred_check
      _
    $region3: #{tpu_custom_call.1} parent=1 // pred_check_branch
      %10 = sbr.rel (0) target = $region5
    $region4: #{tpu_custom_call.1} parent=1 // pred_region
      %s12 = ssub.s32 384, 384
      %13 = vsyncadd [#allocation3], %s12
      %s14 = sshll.u32 [#allocation2], 4
      %s15 = int_to_ptr.vmem [resolvable:$true] %s14
      %20 = dma.hbm_to_vmem [thread:$0]  %s0, 384, %s15, [#allocation3], 128, 128, 8
    $region5: #{tpu_custom_call.1} parent=1 // pred_fallthru
      _
    // Predicated region
    $region6: #{tpu_custom_call.1} parent=1 // pred_check
      _
    $region7: #{tpu_custom_call.1} parent=1 // pred_check_branch
      %22 = sbr.rel (0) target = $region9
    $region8: #{tpu_custom_call.1} parent=1 // pred_region
      _
    $region9: #{tpu_custom_call.1} parent=1 // pred_fallthru
      _
    // Predicated region
    $region10: #{tpu_custom_call.1} parent=1 // pred_check
      _
    $region11: #{tpu_custom_call.1} parent=1 // pred_check_branch
      %24 = sbr.rel (0) target = $region13
    $region12: #{tpu_custom_call.1} parent=1 // pred_region
      %25 = dma.done [#allocation3], 384
    $region13: #{tpu_custom_call.1} parent=1 // pred_fallthru
      _
    %v26 = vld [vmem:[#allocation2] sm:$0xff]
    %v27 = vld [vmem:[#allocation2 + $0x8] sm:$0xff]
    %v28 = vld [vmem:[#allocation2 + $0x10] sm:$0xff]
    %v29 = vld [vmem:[%s1] sm:$0x3]
    %31 = vset.pattern.permute.xlu0 2
    %32 = vperm.xlu0 %31, %v26
    %v33 = vpop.permute.xlu0 %32
    %36 = vset.pattern.permute.xlu0 2
    %37 = vperm.xlu0 %36, %v27
    %v38 = vpop.permute.xlu0 %37
    %vm40 = vcmask 15360
    %v41 = vsel %vm40, %v26, 0
    %v43 = vsel %vm40, %v27, 0
    %vm45 = vcmask 1041408
    %v47 = vsel %vm45, %v29, 0
    %49 = vmatprep.subr.mxu0 0.0
    %50 = vmatpush1.msra.mxu0 %v47
    %51 = vmatprep.subr.mxu0 0.0
    %52 = vmatpush1.msra.mxu0 0.0
    %53 = vmatprep.subr.mxu0 0.0
    %54 = vmatpush1.msra.mxu0 0.0
    %55 = vmatprep.subr.mxu0 0.0
    %56 = vmatpush1.msra.mxu0 0.0
    %57 = vmatprep.subr.mxu0 0.0
    %58 = vmatpush1.msra.mxu0 0.0
    %59 = vmatprep.subr.mxu0 0.0
    %60 = vmatpush1.msra.mxu0 0.0
    %61 = vmatprep.subr.mxu0 0.0
    %62 = vmatpush1.msra.mxu0 0.0
    %63 = vmatprep.subr.mxu0 0.0
    %64 = vmatpush1.msra.mxu0 0.0
    %65 = vmatprep.subr.mxu0 0.0
    %66 = vmatpush1.msra.mxu0 0.0
    %67 = vmatprep.subr.mxu0 0.0
    %68 = vmatpush1.msra.mxu0 0.0
    %69 = vmatprep.subr.mxu0 0.0
    %70 = vmatpush1.msra.mxu0 0.0
    %71 = vmatprep.subr.mxu0 0.0
    %72 = vmatpush1.msra.mxu0 0.0
    %73 = vmatprep.subr.mxu0 0.0
    %74 = vmatpush1.msra.mxu0 0.0
    %75 = vmatprep.subr.mxu0 0.0
    %76 = vmatpush1.msra.mxu0 0.0
    %77 = vmatprep.subr.mxu0 0.0
    %78 = vmatpush1.msra.mxu0 0.0
    %79 = vmatprep.subr.mxu0 0.0
    %80 = vmatpush1.msra.mxu0 0.0
    %81 = vmatprep.subr.mxu0 0.0
    %82 = vmatpush1.msra.mxu0 0.0
    %83 = vmatprep.subr.mxu0 0.0
    %84 = vmatpush1.msra.mxu0 0.0
    %85 = vmatprep.subr.mxu0 0.0
    %86 = vmatpush1.msra.mxu0 0.0
    %87 = vmatprep.subr.mxu0 0.0
    %88 = vmatpush1.msra.mxu0 0.0
    %89 = vmatprep.subr.mxu0 0.0
    %90 = vmatpush1.msra.mxu0 0.0
    %91 = vmatprep.subr.mxu0 0.0
    %92 = vmatpush1.msra.mxu0 0.0
    %93 = vmatprep.subr.mxu0 0.0
    %94 = vmatpush1.msra.mxu0 0.0
    %95 = vmatprep.subr.mxu0 0.0
    %96 = vmatpush1.msra.mxu0 0.0
    %97 = vmatprep.subr.mxu0 0.0
    %98 = vmatpush1.msra.mxu0 0.0
    %99 = vmatprep.subr.mxu0 0.0
    %100 = vmatpush1.msra.mxu0 0.0
    %101 = vmatprep.subr.mxu0 0.0
    %102 = vmatpush1.msra.mxu0 0.0
    %103 = vmatprep.subr.mxu0 0.0
    %104 = vmatpush1.msra.mxu0 0.0
    %105 = vmatprep.subr.mxu0 0.0
    %106 = vmatpush1.msra.mxu0 0.0
    %107 = vmatprep.subr.mxu0 0.0
    %108 = vmatpush1.msra.mxu0 0.0
    %109 = vmatprep.subr.mxu0 0.0
    %110 = vmatpush1.msra.mxu0 0.0
    %111 = vmatprep.subr.mxu0 0.0
    %112 = vmatpush1.msra.mxu0 0.0
    %113 = vmatprep.mubr.f32.mxu0 0.0
    %114 = vmatmul.mubr.f32.gmra.mrb[0].mxu0 %v41
    %v115 = vpop.f32.mrb[0].mxu0
    %v116 = vadd.f32 %v33, %v115
    %v117 = vpop.f32.mrb[0].mxu0
    %118 = vmatprep.mubr.f32.mxu0 0.0
    %119 = vmatmul.mubr.f32.gmra.mrb[0].mxu0 %v43
    %v120 = vpop.f32.mrb[0].mxu0
    %v121 = vadd.f32 %v38, %v120
    %v122 = vpop.f32.mrb[0].mxu0
    %123 = vdwg.mxu0
    %v124 = vmax.f32 %v116, 0.0
    %v125 = vmax.f32 %v121, 0.0
    %127 = vset.pattern.permute.xlu0 16
    %128 = vperm.xlu0 %127, %v28
    %v129 = vpop.permute.xlu0 %128
    %vm131 = vcmask 130048
    %v132 = vsel %vm131, %v28, 0
    %134 = vmatprep.subr.mxu0 0.0
    %135 = vmatpush1.msra.mxu0 %v124
    %136 = vmatprep.subr.mxu0 0.0
    %137 = vmatpush1.msra.mxu0 %v125
    %138 = vmatprep.subr.mxu0 0.0
    %139 = vmatpush1.msra.mxu0 0.0
    %140 = vmatprep.subr.mxu0 0.0
    %141 = vmatpush1.msra.mxu0 0.0
    %142 = vmatprep.subr.mxu0 0.0
    %143 = vmatpush1.msra.mxu0 0.0
    %144 = vmatprep.subr.mxu0 0.0
    %145 = vmatpush1.msra.mxu0 0.0
    %146 = vmatprep.subr.mxu0 0.0
    %147 = vmatpush1.msra.mxu0 0.0
    %148 = vmatprep.subr.mxu0 0.0
    %149 = vmatpush1.msra.mxu0 0.0
    %150 = vmatprep.subr.mxu0 0.0
    %151 = vmatpush1.msra.mxu0 0.0
    %152 = vmatprep.subr.mxu0 0.0
    %153 = vmatpush1.msra.mxu0 0.0
    %154 = vmatprep.subr.mxu0 0.0
    %155 = vmatpush1.msra.mxu0 0.0
    %156 = vmatprep.subr.mxu0 0.0
    %157 = vmatpush1.msra.mxu0 0.0
    %158 = vmatprep.subr.mxu0 0.0
    %159 = vmatpush1.msra.mxu0 0.0
    %160 = vmatprep.subr.mxu0 0.0
    %161 = vmatpush1.msra.mxu0 0.0
    %162 = vmatprep.subr.mxu0 0.0
    %163 = vmatpush1.msra.mxu0 0.0
    %164 = vmatprep.subr.mxu0 0.0
    %165 = vmatpush1.msra.mxu0 0.0
    %166 = vmatprep.subr.mxu0 0.0
    %167 = vmatpush1.msra.mxu0 0.0
    %168 = vmatprep.subr.mxu0 0.0
    %169 = vmatpush1.msra.mxu0 0.0
    %170 = vmatprep.subr.mxu0 0.0
    %171 = vmatpush1.msra.mxu0 0.0
    %172 = vmatprep.subr.mxu0 0.0
    %173 = vmatpush1.msra.mxu0 0.0
    %174 = vmatprep.subr.mxu0 0.0
    %175 = vmatpush1.msra.mxu0 0.0
    %176 = vmatprep.subr.mxu0 0.0
    %177 = vmatpush1.msra.mxu0 0.0
    %178 = vmatprep.subr.mxu0 0.0
    %179 = vmatpush1.msra.mxu0 0.0
    %180 = vmatprep.subr.mxu0 0.0
    %181 = vmatpush1.msra.mxu0 0.0
    %182 = vmatprep.subr.mxu0 0.0
    %183 = vmatpush1.msra.mxu0 0.0
    %184 = vmatprep.subr.mxu0 0.0
    %185 = vmatpush1.msra.mxu0 0.0
    %186 = vmatprep.subr.mxu0 0.0
    %187 = vmatpush1.msra.mxu0 0.0
    %188 = vmatprep.subr.mxu0 0.0
    %189 = vmatpush1.msra.mxu0 0.0
    %190 = vmatprep.subr.mxu0 0.0
    %191 = vmatpush1.msra.mxu0 0.0
    %192 = vmatprep.subr.mxu0 0.0
    %193 = vmatpush1.msra.mxu0 0.0
    %194 = vmatprep.subr.mxu0 0.0
    %195 = vmatpush1.msra.mxu0 0.0
    %196 = vmatprep.subr.mxu0 0.0
    %197 = vmatpush1.msra.mxu0 0.0
    %198 = vmatprep.mubr.f32.mxu0 0.0
    %199 = vmatmul.mubr.f32.gmra.mrb[0].mxu0 %v132
    %v200 = vpop.f32.mrb[0].mxu0
    %v201 = vadd.f32 %v129, %v200
    %v202 = vpop.f32.mrb[0].mxu0
    %203 = vdwg.mxu0
    %v204 = vmax.f32 %v201, 0.0
    %205 = vset.pattern.permute.xlu0 17
    %206 = vperm.xlu0 %205, %v28
    %v207 = vpop.permute.xlu0 %206
    %v209 = vmul.f32 %v207, %v204
    %v210 = vrot.slane %v209, 4
    %v211 = vadd.f32 %v209, %v210
    %v212 = vrot.slane %v211, 2
    %v213 = vadd.f32 %v211, %v212
    %v214 = vrot.slane %v213, 1
    %v215 = vadd.f32 %v213, %v214
    %216 = vset.pattern.permute.xlu0 18
    %217 = vperm.xlu0 %216, %v28
    %v218 = vpop.permute.xlu0 %217
    %v220 = vadd.f32 %v215, %v218
    %221 = vst [vmem:[#allocation5] sm:$0x1] %v220
    // Predicated region
    $region14: #{tpu_custom_call.1} parent=1 // pred_check
      _
    $region15: #{tpu_custom_call.1} parent=1 // pred_check_branch
      %223 = sbr.rel (0) target = $region17
    $region16: #{tpu_custom_call.1} parent=1 // pred_region
      %s225 = ssub.s32 16, 16
      %226 = vsyncadd [#allocation4], %s225
      %s228 = sshll.u32 [#allocation5], 4
      %s229 = int_to_ptr.vmem [resolvable:$true] %s228
      %231 = dma.vmem_to_hbm [thread:$0]  %s229, 16, %s2, [#allocation4]
    $region17: #{tpu_custom_call.1} parent=1 // pred_fallthru
      _
    // Predicated region
    $region18: #{tpu_custom_call.1} parent=1 // pred_check
      _
    $region19: #{tpu_custom_call.1} parent=1 // pred_check_branch
      %233 = sbr.rel (0) target = $region21
    $region20: #{tpu_custom_call.1} parent=1 // pred_region
      %234 = dma.done [#allocation4], 16
    $region21: #{tpu_custom_call.1} parent=1 // pred_fallthru
      _
    %235 = vsyncpa [#allocation3], 1
    %236 = vsyncpa [#allocation4], 1

</llo_original>
